<compile_context>
chip_gen: v7x
topology: tpu7x:2x2x1
jax: 0.10.0
libtpu: 0.0.40
codegen_flags: <defaults>
</compile_context>

<pallas_src>
import math

import jax
import jax.numpy as jnp
from jax.experimental import pallas as pl
from jax.experimental.pallas import tpu as pltpu


def _round_up(n: int, m: int) -> int:
    return ((n + m - 1) // m) * m


def _vmem_plan():
    """Return (working-set budget bytes, vmem_limit_bytes) for this chip."""
    try:
        cap = int(pltpu.get_tpu_info().vmem_capacity_bytes)
    except Exception:
        cap = 64 << 20  # conservative fallback (v7x per-TC VMEM)
    budget = max(8 << 20, min(cap // 3, 48 << 20))
    vmem_limit = min(int(cap * 0.9), 2 * budget + (16 << 20))
    return budget, int(vmem_limit)


def _pick_block_rows(M: int, D: int, itemsize: int, budget: int) -> int:
    # Per-row VMEM bytes: double-buffered input + output tiles (2 bufs each)
    # plus ~3 f32 temporaries of the row inside the kernel body.
    bytes_per_row = 2 * 2 * D * itemsize + 3 * D * 4
    tm = budget // max(bytes_per_row, 1)
    tm = (tm // 8) * 8
    tm = max(8, min(tm, 1024))
    # No point tiling beyond the (8-aligned) number of rows.
    tm = min(tm, _round_up(M, 8))
    return tm


def _make_ln_kernel(eps: float, features: int):
    """Plain path: one kernel row == one LayerNorm row of width D."""
    inv_nm1 = 1.0 / max(features - 1, 1)  # guard D == 1

    def kernel(x_ref, alpha_ref, beta_ref, o_ref):
        x = x_ref[...].astype(jnp.float32)
        mean = jnp.mean(x, axis=-1, keepdims=True)
        centered = x - mean
        var = jnp.sum(centered * centered, axis=-1, keepdims=True) * jnp.float32(inv_nm1)
        std = jnp.sqrt(var)
        # Exact reciprocal: operand is only (tm, 1); approx=True was evaluated but
        # kept exact so the kernel matches the f32 reference to 1e-5.
        inv = pl.reciprocal(std + jnp.float32(eps), approx=False)
        y = (centered * inv * alpha_ref[...].astype(jnp.float32)
             + beta_ref[...].astype(jnp.float32))
        o_ref[...] = y.astype(o_ref.dtype)

    return kernel


def _make_folded_ln_kernel(eps: float, features: int):
    """Folded path: each kernel row holds g = 128//D real rows (lane-dense 128).

    Per-segment (width-D) sums are computed on the MXU with a block-diagonal
    ones matrix, so mean/var never mix different real rows.
    """
    inv_n = 1.0 / features
    inv_nm1 = 1.0 / max(features - 1, 1)

    def kernel(x_ref, alpha_ref, beta_ref, seg_ref, o_ref):
        x = x_ref[...].astype(jnp.float32)
        seg = seg_ref[...]  # (gD, gD) block-diagonal ones, f32
        mean = jnp.dot(x, seg, preferred_element_type=jnp.float32,
                       precision=jax.lax.Precision.HIGHEST) * jnp.float32(inv_n)
        centered = x - mean
        var = jnp.dot(centered * centered, seg, preferred_element_type=jnp.float32,
                      precision=jax.lax.Precision.HIGHEST) * jnp.float32(inv_nm1)
        std = jnp.sqrt(var)
        inv = pl.reciprocal(std + jnp.float32(eps), approx=False)
        y = (centered * inv * alpha_ref[...].astype(jnp.float32)
             + beta_ref[...].astype(jnp.float32))
        o_ref[...] = y.astype(o_ref.dtype)

    return kernel


def layer_normalization(x, alpha, beta, *, eps: float = 1e-5, block_rows: int | None = None):
    """LayerNormalization forward.

    x: [..., D]; alpha: [D]; beta: [D].
    Normalizes over the last axis with torch-style unbiased std and (std + eps).
    """
    orig_shape = x.shape
    D = orig_shape[-1]
    assert alpha.shape == (D,) and beta.shape == (D,)
    M = math.prod(orig_shape[:-1]) if len(orig_shape) > 1 else 1

    # Lane-dense repack for small D (masked vst.msk at D<128 is the big lever).
    fold = (D < 128) and (128 % D == 0) and (128 // D > 1) and (M % (128 // D) == 0)

    if fold:
        g = 128 // D
        Dk = g * D              # kernel feature width == 128 lanes
        Mk = M // g
        x2d = x.reshape(Mk, Dk)                       # contiguous -> free reshape
        alpha_k = jnp.tile(alpha, g).reshape(1, Dk)
        beta_k = jnp.tile(beta, g).reshape(1, Dk)
        seg_id = jnp.arange(Dk, dtype=jnp.int32) // D
        seg = (seg_id[:, None] == seg_id[None, :]).astype(jnp.float32)  # (Dk, Dk)
        kernel = _make_folded_ln_kernel(eps, D)
        extra_inputs = (seg,)
        extra_specs = [pl.BlockSpec((Dk, Dk), lambda i: (0, 0))]
    else:
        Dk = D
        Mk = M
        x2d = x.reshape(Mk, Dk)
        alpha_k = alpha.reshape(1, Dk)
        beta_k = beta.reshape(1, Dk)
        kernel = _make_ln_kernel(eps, D)
        extra_inputs = ()
        extra_specs = []

    budget, vmem_limit = _vmem_plan()
    itemsize = jnp.dtype(x.dtype).itemsize
    if block_rows is None:
        tm = _pick_block_rows(Mk, Dk, itemsize, budget)
    else:
        tm = max(8, (block_rows // 8) * 8)

    # No padding / slicing: partial edge block is masked by Pallas.
    grid = (pl.cdiv(Mk, tm),)

    out2d = pl.pallas_call(
        kernel,
        out_shape=jax.ShapeDtypeStruct((Mk, Dk), x.dtype),
        grid_spec=pltpu.PrefetchScalarGridSpec(
            num_scalar_prefetch=0,
            grid=grid,
            in_specs=[
                pl.BlockSpec((tm, Dk), lambda i: (i, 0)),   # x row tile (streams)
                pl.BlockSpec((1, Dk), lambda i: (0, 0)),    # alpha (resident)
                pl.BlockSpec((1, Dk), lambda i: (0, 0)),    # beta  (resident)
            ] + extra_specs,
            out_specs=pl.BlockSpec((tm, Dk), lambda i: (i, 0)),
        ),
        compiler_params=pltpu.CompilerParams(
            dimension_semantics=("parallel",),
            vmem_limit_bytes=vmem_limit,
        ),
    )(x2d, alpha_k, beta_k, *extra_inputs)

    return out2d.reshape(orig_shape)


def _reference(x, alpha, beta, eps=1e-5):
    mean = jnp.mean(x, axis=-1, keepdims=True)
    std = jnp.std(x, axis=-1, keepdims=True, ddof=1)  # unbiased, like torch
    return (x - mean) / (std + eps) * alpha + beta


if __name__ == "__main__":
    # Shapes implied by the module: (batch=2, seq=8, hidden/features=32).
    B, S, D = 2, 8, 32

    key = jax.random.PRNGKey(0)
    kx, ka, kb = jax.random.split(key, 3)

    x = jax.random.normal(kx, (B, S, D), jnp.float32)
    # Module init is alpha=ones, beta=zeros; perturb so the affine path is tested.
    alpha = 1.0 + 0.1 * jax.random.normal(ka, (D,), jnp.float32)
    beta = 0.1 * jax.random.normal(kb, (D,), jnp.float32)

    out = layer_normalization(x, alpha, beta, eps=1e-5)
    out = jax.block_until_ready(out)
    ref = _reference(x, alpha, beta, eps=1e-5)
    assert out.shape == (B, S, D)
    assert jnp.allclose(out, ref, atol=1e-5, rtol=1e-5), "mismatch vs reference (folded path)"

    # Also exercise the non-folded (D >= 128) path with a ragged row count
    # (M=13 -> masked edge block, no padding copy).
    D2, M2 = 256, 13
    x2 = jax.random.normal(kx, (M2, D2), jnp.float32)
    a2 = jnp.ones((D2,), jnp.float32)
    b2 = jnp.zeros((D2,), jnp.float32)
    out2 = jax.block_until_ready(layer_normalization(x2, a2, b2, eps=1e-5))
    ref2 = _reference(x2, a2, b2, eps=1e-5)
    assert jnp.allclose(out2, ref2, atol=1e-5, rtol=1e-5), "mismatch vs reference (plain path)"

    print("KERNEL_OK")
</pallas_src>

<mosaic_0001>
module attributes {stable_mosaic.version = 11 : i64} {
  func.func @kernel(%arg0: i32, %arg1: memref<8x128xf32, #tpu.memory_space<vmem>>, %arg2: memref<1x128xf32, #tpu.memory_space<vmem>>, %arg3: memref<1x128xf32, #tpu.memory_space<vmem>>, %arg4: memref<128x128xf32, #tpu.memory_space<vmem>>, %arg5: memref<8x128xf32, #tpu.memory_space<vmem>>) attributes {dimension_semantics = [#tpu.dimension_semantics<parallel>], iteration_bounds = array<i64: 1>, scalar_prefetch = 0 : i64, scratch_operands = 0 : i64, tpu.core_type = #tpu.core_type<tc>, window_params = [{transform_indices = @transform_0, window_bounds = array<i64: 8, 128>}, {pipeline_mode = #tpu.pipeline_mode<synchronous>, transform_indices = @transform_1, window_bounds = array<i64: 1, 128>}, {pipeline_mode = #tpu.pipeline_mode<synchronous>, transform_indices = @transform_2, window_bounds = array<i64: 1, 128>}, {pipeline_mode = #tpu.pipeline_mode<synchronous>, transform_indices = @transform_3, window_bounds = array<i64: 128, 128>}, {transform_indices = @transform_4, window_bounds = array<i64: 8, 128>}]} {
    %c0 = arith.constant 0 : index
    %c0_0 = arith.constant 0 : index
    %0 = vector.load %arg1[%c0, %c0_0] : memref<8x128xf32, #tpu.memory_space<vmem>>, vector<8x128xf32>
    %c0_1 = arith.constant 0 : index
    %c0_2 = arith.constant 0 : index
    %1 = vector.load %arg4[%c0_1, %c0_2] : memref<128x128xf32, #tpu.memory_space<vmem>>, vector<128x128xf32>
    %cst = arith.constant dense<0.000000e+00> : vector<8x128xf32>
    %2 = tpu.matmul %0, %1, %cst {dimension_numbers = #tpu.dot_dimension_numbers<[1], [0], [0], [1], [0, 0, 1, 1], [], []>, precision = #tpu.contract_precision<fp32>} : vector<8x128xf32>, vector<128x128xf32>, vector<8x128xf32> -> vector<8x128xf32>
    %cst_3 = arith.constant 3.125000e-02 : f32
    %3 = vector.broadcast %cst_3 : f32 to vector<8x128xf32>
    %4 = arith.mulf %2, %3 : vector<8x128xf32>
    %5 = arith.subf %0, %4 : vector<8x128xf32>
    %6 = arith.mulf %5, %5 : vector<8x128xf32>
    %cst_4 = arith.constant dense<0.000000e+00> : vector<8x128xf32>
    %7 = tpu.matmul %6, %1, %cst_4 {dimension_numbers = #tpu.dot_dimension_numbers<[1], [0], [0], [1], [0, 0, 1, 1], [], []>, precision = #tpu.contract_precision<fp32>} : vector<8x128xf32>, vector<128x128xf32>, vector<8x128xf32> -> vector<8x128xf32>
    %cst_5 = arith.constant 0.0322580636 : f32
    %8 = vector.broadcast %cst_5 : f32 to vector<8x128xf32>
    %9 = arith.mulf %7, %8 : vector<8x128xf32>
    %10 = math.sqrt %9 : vector<8x128xf32>
    %cst_6 = arith.constant 9.99999974E-6 : f32
    %11 = vector.broadcast %cst_6 : f32 to vector<8x128xf32>
    %12 = arith.addf %10, %11 : vector<8x128xf32>
    %13 = tpu.reciprocal %12 : vector<8x128xf32> -> vector<8x128xf32>
    %14 = arith.mulf %5, %13 : vector<8x128xf32>
    %c0_7 = arith.constant 0 : index
    %c0_8 = arith.constant 0 : index
    %15 = vector.load %arg2[%c0_7, %c0_8] : memref<1x128xf32, #tpu.memory_space<vmem>>, vector<1x128xf32>
    %16 = vector.broadcast %15 : vector<1x128xf32> to vector<8x128xf32>
    %17 = arith.mulf %14, %16 : vector<8x128xf32>
    %c0_9 = arith.constant 0 : index
    %c0_10 = arith.constant 0 : index
    %18 = vector.load %arg3[%c0_9, %c0_10] : memref<1x128xf32, #tpu.memory_space<vmem>>, vector<1x128xf32>
    %19 = vector.broadcast %18 : vector<1x128xf32> to vector<8x128xf32>
    %20 = arith.addf %17, %19 : vector<8x128xf32>
    %c0_11 = arith.constant 0 : index
    %c0_12 = arith.constant 0 : index
    %21 = vector.load %arg5[%c0_11, %c0_12] : memref<8x128xf32, #tpu.memory_space<vmem>>, vector<8x128xf32>
    tpu.vector_store %arg5[%c0_11, %c0_12], %20 {strides = array<i32>} : memref<8x128xf32, #tpu.memory_space<vmem>>, vector<8x128xf32>,
    return
  }
  func.func @transform_0(%arg0: i32) -> (i32, i32) {
    %c0_i32 = arith.constant 0 : i32
    %c0_i32_0 = arith.constant 0 : i32
    return %arg0, %c0_i32 : i32, i32
  }
  func.func @transform_1(%arg0: i32) -> (i32, i32) {
    %c0_i32 = arith.constant 0 : i32
    %c0_i32_0 = arith.constant 0 : i32
    %c0_i32_1 = arith.constant 0 : i32
    return %c0_i32, %c0_i32_0 : i32, i32
  }
  func.func @transform_2(%arg0: i32) -> (i32, i32) {
    %c0_i32 = arith.constant 0 : i32
    %c0_i32_0 = arith.constant 0 : i32
    %c0_i32_1 = arith.constant 0 : i32
    return %c0_i32, %c0_i32_0 : i32, i32
  }
  func.func @transform_3(%arg0: i32) -> (i32, i32) {
    %c0_i32 = arith.constant 0 : i32
    %c0_i32_0 = arith.constant 0 : i32
    %c0_i32_1 = arith.constant 0 : i32
    return %c0_i32, %c0_i32_0 : i32, i32
  }
  func.func @transform_4(%arg0: i32) -> (i32, i32) {
    %c0_i32 = arith.constant 0 : i32
    %c0_i32_0 = arith.constant 0 : i32
    return %arg0, %c0_i32 : i32, i32
  }
}

</mosaic_0001>

<llo_original>
// kernel: tpu_custom_call.1
$region0: #{tpu_custom_call.1}
  #allocation0 [shape = 'u32[]', space=smem, size = 0x4, offset = 0x4, fixed_abs, tag = 'smem constant byte address 0x4 - core index']
  #allocation1 [shape = 'u32[144,128]{1,0:T(1,128)}', space=vmem, size = 0x12000, scoped, tag = 'internal scratch']
  %s0 = inlined_call_operand.hbm [shape: f32[4,128], index: 0, kind: input, shape index: {}]
  %s1 = inlined_call_operand.vmem [shape: f32[1,128], index: 1, kind: input, shape index: {}]
  %s2 = inlined_call_operand.vmem [shape: f32[1,128], index: 2, kind: input, shape index: {}]
  %s3 = inlined_call_operand.hbm [shape: f32[128,128], index: 3, kind: input, shape index: {}]
  %s4 = inlined_call_operand.hbm [shape: f32[4,128], index: 4, kind: output, shape index: {}]
  %s5 = sld [smem:[#allocation0]]
  $region34: #{tpu_custom_call.1} parent=0
    _
  %s7 = ssub.s32 1, %s5
  %s8 = scalar_select 0, %s7, %s5
  $region1: #{tpu_custom_call.1} parent=0
    #allocation2 [shape = 'u8[4096]{0}', space=vmem, size = 0x1000, scoped, tag = 'input window, operand 0, single buffered']
    #allocation3 [shape = 's32[1]{0}', space=sflag, size = 0x4, scoped, tag = 'scoped memory for tpu_custom_call.1']
    #allocation4 [shape = 's32[1]{0}', space=sflag, size = 0x4, scoped, tag = 'scoped memory for tpu_custom_call.1']
    #allocation5 [shape = 'u8[65536]{0}', space=vmem, size = 0x10000, scoped, tag = 'input window, operand 3, single buffered']
    #allocation6 [shape = 's32[1]{0}', space=sflag, size = 0x4, scoped, tag = 'scoped memory for tpu_custom_call.1']
    #allocation7 [shape = 'u8[4096]{0}', space=vmem, size = 0x1000, scoped, tag = 'output window, operand 0, single buffered']
    %9 = vsyncpa [#allocation3], 0
    %10 = vsyncpa [#allocation6], 0
    %11 = vsyncpa [#allocation4], 0
    // Predicated region
    $region2: #{tpu_custom_call.1} parent=1 // pred_check
      _
    $region3: #{tpu_custom_call.1} parent=1 // pred_check_branch
      %13 = sbr.rel (0) target = $region5
    $region4: #{tpu_custom_call.1} parent=1 // pred_region
      %s15 = ssub.s32 128, 64
      %16 = vsyncadd [#allocation3], %s15
      %s17 = sshll.u32 [#allocation2], 4
      %s18 = int_to_ptr.vmem [resolvable:$true] %s17
      %23 = dma.hbm_to_vmem [thread:$0]  %s0, 64, %s18, [#allocation3], 64, 64, 4
    $region5: #{tpu_custom_call.1} parent=1 // pred_fallthru
      _
    // Predicated region
    $region6: #{tpu_custom_call.1} parent=1 // pred_check
      _
    $region7: #{tpu_custom_call.1} parent=1 // pred_check_branch
      %25 = sbr.rel (0) target = $region9
    $region8: #{tpu_custom_call.1} parent=1 // pred_region
      _
    $region9: #{tpu_custom_call.1} parent=1 // pred_fallthru
      _
    // Predicated region
    $region10: #{tpu_custom_call.1} parent=1 // pred_check
      _
    $region11: #{tpu_custom_call.1} parent=1 // pred_check_branch
      %27 = sbr.rel (0) target = $region13
    $region12: #{tpu_custom_call.1} parent=1 // pred_region
      _
    $region13: #{tpu_custom_call.1} parent=1 // pred_fallthru
      _
    // Predicated region
    $region14: #{tpu_custom_call.1} parent=1 // pred_check
      _
    $region15: #{tpu_custom_call.1} parent=1 // pred_check_branch
      %29 = sbr.rel (0) target = $region17
    $region16: #{tpu_custom_call.1} parent=1 // pred_region
      %s31 = ssub.s32 2048, 2048
      %32 = vsyncadd [#allocation6], %s31
      %s33 = sshll.u32 [#allocation5], 4
      %s34 = int_to_ptr.vmem [resolvable:$true] %s33
      %39 = dma.hbm_to_vmem [thread:$0]  %s3, 2048, %s34, [#allocation6], 128, 128, 8
    $region17: #{tpu_custom_call.1} parent=1 // pred_fallthru
      _
    // Predicated region
    $region18: #{tpu_custom_call.1} parent=1 // pred_check
      _
    $region19: #{tpu_custom_call.1} parent=1 // pred_check_branch
      %41 = sbr.rel (0) target = $region21
    $region20: #{tpu_custom_call.1} parent=1 // pred_region
      %42 = dma.done [#allocation3], 128
    $region21: #{tpu_custom_call.1} parent=1 // pred_fallthru
      _
    // Predicated region
    $region22: #{tpu_custom_call.1} parent=1 // pred_check
      _
    $region23: #{tpu_custom_call.1} parent=1 // pred_check_branch
      %44 = sbr.rel (0) target = $region25
    $region24: #{tpu_custom_call.1} parent=1 // pred_region
      %45 = dma.done [#allocation6], 2048
    $region25: #{tpu_custom_call.1} parent=1 // pred_fallthru
      _
    %v46 = vld [vmem:[#allocation2] sm:$0xff]
    %v47 = vld [vmem:[#allocation5] sm:$0xff]
    %v48 = vld [vmem:[#allocation5 + $0x8] sm:$0xff]
    %v49 = vld [vmem:[#allocation5 + $0x10] sm:$0xff]
    %v50 = vld [vmem:[#allocation5 + $0x18] sm:$0xff]
    %v51 = vld [vmem:[#allocation5 + $0x20] sm:$0xff]
    %v52 = vld [vmem:[#allocation5 + $0x28] sm:$0xff]
    %v53 = vld [vmem:[#allocation5 + $0x30] sm:$0xff]
    %v54 = vld [vmem:[#allocation5 + $0x38] sm:$0xff]
    %v55 = vld [vmem:[#allocation5 + $0x40] sm:$0xff]
    %v56 = vld [vmem:[#allocation5 + $0x48] sm:$0xff]
    %v57 = vld [vmem:[#allocation5 + $0x50] sm:$0xff]
    %v58 = vld [vmem:[#allocation5 + $0x58] sm:$0xff]
    %v59 = vld [vmem:[#allocation5 + $0x60] sm:$0xff]
    %v60 = vld [vmem:[#allocation5 + $0x68] sm:$0xff]
    %v61 = vld [vmem:[#allocation5 + $0x70] sm:$0xff]
    %v62 = vld [vmem:[#allocation5 + $0x78] sm:$0xff]
    %63 = vmatprep.subr.mxu0 0.0
    %v64 = vand.u32 %v47, 4294901760
    %65 = vmatpush1.msra.mxu0 %v64
    %66 = vmatprep.subr.mxu0 0.0
    %v67 = vand.u32 %v48, 4294901760
    %68 = vmatpush1.msra.mxu0 %v67
    %69 = vmatprep.subr.mxu0 0.0
    %v70 = vand.u32 %v49, 4294901760
    %71 = vmatpush1.msra.mxu0 %v70
    %72 = vmatprep.subr.mxu0 0.0
    %v73 = vand.u32 %v50, 4294901760
    %74 = vmatpush1.msra.mxu0 %v73
    %75 = vmatprep.subr.mxu0 0.0
    %v76 = vand.u32 %v51, 4294901760
    %77 = vmatpush1.msra.mxu0 %v76
    %78 = vmatprep.subr.mxu0 0.0
    %v79 = vand.u32 %v52, 4294901760
    %80 = vmatpush1.msra.mxu0 %v79
    %81 = vmatprep.subr.mxu0 0.0
    %v82 = vand.u32 %v53, 4294901760
    %83 = vmatpush1.msra.mxu0 %v82
    %84 = vmatprep.subr.mxu0 0.0
    %v85 = vand.u32 %v54, 4294901760
    %86 = vmatpush1.msra.mxu0 %v85
    %87 = vmatprep.subr.mxu0 0.0
    %v88 = vand.u32 %v55, 4294901760
    %89 = vmatpush1.msra.mxu0 %v88
    %90 = vmatprep.subr.mxu0 0.0
    %v91 = vand.u32 %v56, 4294901760
    %92 = vmatpush1.msra.mxu0 %v91
    %93 = vmatprep.subr.mxu0 0.0
    %v94 = vand.u32 %v57, 4294901760
    %95 = vmatpush1.msra.mxu0 %v94
    %96 = vmatprep.subr.mxu0 0.0
    %v97 = vand.u32 %v58, 4294901760
    %98 = vmatpush1.msra.mxu0 %v97
    %99 = vmatprep.subr.mxu0 0.0
    %v100 = vand.u32 %v59, 4294901760
    %101 = vmatpush1.msra.mxu0 %v100
    %102 = vmatprep.subr.mxu0 0.0
    %v103 = vand.u32 %v60, 4294901760
    %104 = vmatpush1.msra.mxu0 %v103
    %105 = vmatprep.subr.mxu0 0.0
    %v106 = vand.u32 %v61, 4294901760
    %107 = vmatpush1.msra.mxu0 %v106
    %108 = vmatprep.subr.mxu0 0.0
    %v109 = vand.u32 %v62, 4294901760
    %110 = vmatpush1.msra.mxu0 %v109
    %111 = vmatprep.subr.mxu0 0.0
    %112 = vmatpush1.msra.mxu0 0.0
    %113 = vmatprep.subr.mxu0 0.0
    %114 = vmatpush1.msra.mxu0 0.0
    %115 = vmatprep.subr.mxu0 0.0
    %116 = vmatpush1.msra.mxu0 0.0
    %117 = vmatprep.subr.mxu0 0.0
    %118 = vmatpush1.msra.mxu0 0.0
    %119 = vmatprep.subr.mxu0 0.0
    %120 = vmatpush1.msra.mxu0 0.0
    %121 = vmatprep.subr.mxu0 0.0
    %122 = vmatpush1.msra.mxu0 0.0
    %123 = vmatprep.subr.mxu0 0.0
    %124 = vmatpush1.msra.mxu0 0.0
    %125 = vmatprep.subr.mxu0 0.0
    %126 = vmatpush1.msra.mxu0 0.0
    %127 = vmatprep.subr.mxu0 0.0
    %128 = vmatpush1.msra.mxu0 0.0
    %129 = vmatprep.subr.mxu0 0.0
    %130 = vmatpush1.msra.mxu0 0.0
    %131 = vmatprep.subr.mxu0 0.0
    %132 = vmatpush1.msra.mxu0 0.0
    %133 = vmatprep.subr.mxu0 0.0
    %134 = vmatpush1.msra.mxu0 0.0
    %135 = vmatprep.subr.mxu0 0.0
    %136 = vmatpush1.msra.mxu0 0.0
    %137 = vmatprep.subr.mxu0 0.0
    %138 = vmatpush1.msra.mxu0 0.0
    %139 = vmatprep.subr.mxu0 0.0
    %140 = vmatpush1.msra.mxu0 0.0
    %141 = vmatprep.subr.mxu0 0.0
    %142 = vmatpush1.msra.mxu0 0.0
    %143 = vmatprep.mubr.f32.mxu0 0.0
    %v144 = vand.u32 %v46, 4294901760
    %v145 = vsub.f32 %v46, %v144
    %v146 = vand.u32 %v145, 4294901760
    %v147 = vsub.f32 %v145, %v146
    %v148 = vand.u32 %v147, 4294901760
    %149 = vmatmul.mubr.f32.gmra.mrb[0].mxu0 %v148
    %v150 = vpop.f32.mrb[0].mxu0
    %v151 = vadd.f32 0.0, %v150
    %v152 = vpop.f32.mrb[0].mxu0
    %153 = vdwg.mxu0
    %154 = vmatprep.subr.mxu0 0.0
    %v155 = vand.u32 %v47, 4294901760
    %v156 = vsub.f32 %v47, %v155
    %v157 = vand.u32 %v156, 4294901760
    %v158 = vsub.f32 %v156, %v157
    %v159 = vand.u32 %v158, 4294901760
    %160 = vmatpush1.msra.mxu0 %v159
    %161 = vmatprep.subr.mxu0 0.0
    %v162 = vand.u32 %v48, 4294901760
    %v163 = vsub.f32 %v48, %v162
    %v164 = vand.u32 %v163, 4294901760
    %v165 = vsub.f32 %v163, %v164
    %v166 = vand.u32 %v165, 4294901760
    %167 = vmatpush1.msra.mxu0 %v166
    %168 = vmatprep.subr.mxu0 0.0
    %v169 = vand.u32 %v49, 4294901760
    %v170 = vsub.f32 %v49, %v169
    %v171 = vand.u32 %v170, 4294901760
    %v172 = vsub.f32 %v170, %v171
    %v173 = vand.u32 %v172, 4294901760
    %174 = vmatpush1.msra.mxu0 %v173
    %175 = vmatprep.subr.mxu0 0.0
    %v176 = vand.u32 %v50, 4294901760
    %v177 = vsub.f32 %v50, %v176
    %v178 = vand.u32 %v177, 4294901760
    %v179 = vsub.f32 %v177, %v178
    %v180 = vand.u32 %v179, 4294901760
    %181 = vmatpush1.msra.mxu0 %v180
    %182 = vmatprep.subr.mxu0 0.0
    %v183 = vand.u32 %v51, 4294901760
    %v184 = vsub.f32 %v51, %v183
    %v185 = vand.u32 %v184, 4294901760
    %v186 = vsub.f32 %v184, %v185
    %v187 = vand.u32 %v186, 4294901760
    %188 = vmatpush1.msra.mxu0 %v187
    %189 = vmatprep.subr.mxu0 0.0
    %v190 = vand.u32 %v52, 4294901760
    %v191 = vsub.f32 %v52, %v190
    %v192 = vand.u32 %v191, 4294901760
    %v193 = vsub.f32 %v191, %v192
    %v194 = vand.u32 %v193, 4294901760
    %195 = vmatpush1.msra.mxu0 %v194
    %196 = vmatprep.subr.mxu0 0.0
    %v197 = vand.u32 %v53, 4294901760
    %v198 = vsub.f32 %v53, %v197
    %v199 = vand.u32 %v198, 4294901760
    %v200 = vsub.f32 %v198, %v199
    %v201 = vand.u32 %v200, 4294901760
    %202 = vmatpush1.msra.mxu0 %v201
    %203 = vmatprep.subr.mxu0 0.0
    %v204 = vand.u32 %v54, 4294901760
    %v205 = vsub.f32 %v54, %v204
    %v206 = vand.u32 %v205, 4294901760
    %v207 = vsub.f32 %v205, %v206
    %v208 = vand.u32 %v207, 4294901760
    %209 = vmatpush1.msra.mxu0 %v208
    %210 = vmatprep.subr.mxu0 0.0
    %v211 = vand.u32 %v55, 4294901760
    %v212 = vsub.f32 %v55, %v211
    %v213 = vand.u32 %v212, 4294901760
    %v214 = vsub.f32 %v212, %v213
    %v215 = vand.u32 %v214, 4294901760
    %216 = vmatpush1.msra.mxu0 %v215
    %217 = vmatprep.subr.mxu0 0.0
    %v218 = vand.u32 %v56, 4294901760
    %v219 = vsub.f32 %v56, %v218
    %v220 = vand.u32 %v219, 4294901760
    %v221 = vsub.f32 %v219, %v220
    %v222 = vand.u32 %v221, 4294901760
    %223 = vmatpush1.msra.mxu0 %v222
    %224 = vmatprep.subr.mxu0 0.0
    %v225 = vand.u32 %v57, 4294901760
    %v226 = vsub.f32 %v57, %v225
    %v227 = vand.u32 %v226, 4294901760
    %v228 = vsub.f32 %v226, %v227
    %v229 = vand.u32 %v228, 4294901760
    %230 = vmatpush1.msra.mxu0 %v229
    %231 = vmatprep.subr.mxu0 0.0
    %v232 = vand.u32 %v58, 4294901760
    %v233 = vsub.f32 %v58, %v232
    %v234 = vand.u32 %v233, 4294901760
    %v235 = vsub.f32 %v233, %v234
    %v236 = vand.u32 %v235, 4294901760
    %237 = vmatpush1.msra.mxu0 %v236
    %238 = vmatprep.subr.mxu0 0.0
    %v239 = vand.u32 %v59, 4294901760
    %v240 = vsub.f32 %v59, %v239
    %v241 = vand.u32 %v240, 4294901760
    %v242 = vsub.f32 %v240, %v241
    %v243 = vand.u32 %v242, 4294901760
    %244 = vmatpush1.msra.mxu0 %v243
    %245 = vmatprep.subr.mxu0 0.0
    %v246 = vand.u32 %v60, 4294901760
    %v247 = vsub.f32 %v60, %v246
    %v248 = vand.u32 %v247, 4294901760
    %v249 = vsub.f32 %v247, %v248
    %v250 = vand.u32 %v249, 4294901760
    %251 = vmatpush1.msra.mxu0 %v250
    %252 = vmatprep.subr.mxu0 0.0
    %v253 = vand.u32 %v61, 4294901760
    %v254 = vsub.f32 %v61, %v253
    %v255 = vand.u32 %v254, 4294901760
    %v256 = vsub.f32 %v254, %v255
    %v257 = vand.u32 %v256, 4294901760
    %258 = vmatpush1.msra.mxu0 %v257
    %259 = vmatprep.subr.mxu0 0.0
    %v260 = vand.u32 %v62, 4294901760
    %v261 = vsub.f32 %v62, %v260
    %v262 = vand.u32 %v261, 4294901760
    %v263 = vsub.f32 %v261, %v262
    %v264 = vand.u32 %v263, 4294901760
    %265 = vmatpush1.msra.mxu0 %v264
    %266 = vmatprep.subr.mxu0 0.0
    %267 = vmatpush1.msra.mxu0 0.0
    %268 = vmatprep.subr.mxu0 0.0
    %269 = vmatpush1.msra.mxu0 0.0
    %270 = vmatprep.subr.mxu0 0.0
    %271 = vmatpush1.msra.mxu0 0.0
    %272 = vmatprep.subr.mxu0 0.0
    %273 = vmatpush1.msra.mxu0 0.0
    %274 = vmatprep.subr.mxu0 0.0
    %275 = vmatpush1.msra.mxu0 0.0
    %276 = vmatprep.subr.mxu0 0.0
    %277 = vmatpush1.msra.mxu0 0.0
    %278 = vmatprep.subr.mxu0 0.0
    %279 = vmatpush1.msra.mxu0 0.0
    %280 = vmatprep.subr.mxu0 0.0
    %281 = vmatpush1.msra.mxu0 0.0
    %282 = vmatprep.subr.mxu0 0.0
    %283 = vmatpush1.msra.mxu0 0.0
    %284 = vmatprep.subr.mxu0 0.0
    %285 = vmatpush1.msra.mxu0 0.0
    %286 = vmatprep.subr.mxu0 0.0
    %287 = vmatpush1.msra.mxu0 0.0
    %288 = vmatprep.subr.mxu0 0.0
    %289 = vmatpush1.msra.mxu0 0.0
    %290 = vmatprep.subr.mxu0 0.0
    %291 = vmatpush1.msra.mxu0 0.0
    %292 = vmatprep.subr.mxu0 0.0
    %293 = vmatpush1.msra.mxu0 0.0
    %294 = vmatprep.subr.mxu0 0.0
    %295 = vmatpush1.msra.mxu0 0.0
    %296 = vmatprep.subr.mxu0 0.0
    %297 = vmatpush1.msra.mxu0 0.0
    %298 = vmatprep.mubr.f32.mxu0 0.0
    %v299 = vand.u32 %v46, 4294901760
    %300 = vmatmul.mubr.f32.gmra.mrb[0].mxu0 %v299
    %v301 = vpop.f32.mrb[0].mxu0
    %v302 = vadd.f32 %v151, %v301
    %v303 = vpop.f32.mrb[0].mxu0
    %304 = vdwg.mxu0
    %305 = vmatprep.subr.mxu0 0.0
    %v306 = vand.u32 %v47, 4294901760
    %v307 = vsub.f32 %v47, %v306
    %308 = vmatpush1.msra.mxu0 %v307
    %309 = vmatprep.subr.mxu0 0.0
    %v310 = vand.u32 %v48, 4294901760
    %v311 = vsub.f32 %v48, %v310
    %312 = vmatpush1.msra.mxu0 %v311
    %313 = vmatprep.subr.mxu0 0.0
    %v314 = vand.u32 %v49, 4294901760
    %v315 = vsub.f32 %v49, %v314
    %316 = vmatpush1.msra.mxu0 %v315
    %317 = vmatprep.subr.mxu0 0.0
    %v318 = vand.u32 %v50, 4294901760
    %v319 = vsub.f32 %v50, %v318
    %320 = vmatpush1.msra.mxu0 %v319
    %321 = vmatprep.subr.mxu0 0.0
    %v322 = vand.u32 %v51, 4294901760
    %v323 = vsub.f32 %v51, %v322
    %324 = vmatpush1.msra.mxu0 %v323
    %325 = vmatprep.subr.mxu0 0.0
    %v326 = vand.u32 %v52, 4294901760
    %v327 = vsub.f32 %v52, %v326
    %328 = vmatpush1.msra.mxu0 %v327
    %329 = vmatprep.subr.mxu0 0.0
    %v330 = vand.u32 %v53, 4294901760
    %v331 = vsub.f32 %v53, %v330
    %332 = vmatpush1.msra.mxu0 %v331
    %333 = vmatprep.subr.mxu0 0.0
    %v334 = vand.u32 %v54, 4294901760
    %v335 = vsub.f32 %v54, %v334
    %336 = vmatpush1.msra.mxu0 %v335
    %337 = vmatprep.subr.mxu0 0.0
    %v338 = vand.u32 %v55, 4294901760
    %v339 = vsub.f32 %v55, %v338
    %340 = vmatpush1.msra.mxu0 %v339
    %341 = vmatprep.subr.mxu0 0.0
    %v342 = vand.u32 %v56, 4294901760
    %v343 = vsub.f32 %v56, %v342
    %344 = vmatpush1.msra.mxu0 %v343
    %345 = vmatprep.subr.mxu0 0.0
    %v346 = vand.u32 %v57, 4294901760
    %v347 = vsub.f32 %v57, %v346
    %348 = vmatpush1.msra.mxu0 %v347
    %349 = vmatprep.subr.mxu0 0.0
    %v350 = vand.u32 %v58, 4294901760
    %v351 = vsub.f32 %v58, %v350
    %352 = vmatpush1.msra.mxu0 %v351
    %353 = vmatprep.subr.mxu0 0.0
    %v354 = vand.u32 %v59, 4294901760
    %v355 = vsub.f32 %v59, %v354
    %356 = vmatpush1.msra.mxu0 %v355
    %357 = vmatprep.subr.mxu0 0.0
    %v358 = vand.u32 %v60, 4294901760
    %v359 = vsub.f32 %v60, %v358
    %360 = vmatpush1.msra.mxu0 %v359
    %361 = vmatprep.subr.mxu0 0.0
    %v362 = vand.u32 %v61, 4294901760
    %v363 = vsub.f32 %v61, %v362
    %364 = vmatpush1.msra.mxu0 %v363
    %365 = vmatprep.subr.mxu0 0.0
    %v366 = vand.u32 %v62, 4294901760
    %v367 = vsub.f32 %v62, %v366
    %368 = vmatpush1.msra.mxu0 %v367
    %369 = vmatprep.subr.mxu0 0.0
    %370 = vmatpush1.msra.mxu0 0.0
    %371 = vmatprep.subr.mxu0 0.0
    %372 = vmatpush1.msra.mxu0 0.0
    %373 = vmatprep.subr.mxu0 0.0
    %374 = vmatpush1.msra.mxu0 0.0
    %375 = vmatprep.subr.mxu0 0.0
    %376 = vmatpush1.msra.mxu0 0.0
    %377 = vmatprep.subr.mxu0 0.0
    %378 = vmatpush1.msra.mxu0 0.0
    %379 = vmatprep.subr.mxu0 0.0
    %380 = vmatpush1.msra.mxu0 0.0
    %381 = vmatprep.subr.mxu0 0.0
    %382 = vmatpush1.msra.mxu0 0.0
    %383 = vmatprep.subr.mxu0 0.0
    %384 = vmatpush1.msra.mxu0 0.0
    %385 = vmatprep.subr.mxu0 0.0
    %386 = vmatpush1.msra.mxu0 0.0
    %387 = vmatprep.subr.mxu0 0.0
    %388 = vmatpush1.msra.mxu0 0.0
    %389 = vmatprep.subr.mxu0 0.0
    %390 = vmatpush1.msra.mxu0 0.0
    %391 = vmatprep.subr.mxu0 0.0
    %392 = vmatpush1.msra.mxu0 0.0
    %393 = vmatprep.subr.mxu0 0.0
    %394 = vmatpush1.msra.mxu0 0.0
    %395 = vmatprep.subr.mxu0 0.0
    %396 = vmatpush1.msra.mxu0 0.0
    %397 = vmatprep.subr.mxu0 0.0
    %398 = vmatpush1.msra.mxu0 0.0
    %399 = vmatprep.subr.mxu0 0.0
    %400 = vmatpush1.msra.mxu0 0.0
    %401 = vmatprep.mubr.f32.mxu0 0.0
    %v402 = vand.u32 %v46, 4294901760
    %v403 = vsub.f32 %v46, %v402
    %404 = vmatmul.mubr.f32.gmra.mrb[0].mxu0 %v403
    %v405 = vpop.f32.mrb[0].mxu0
    %v406 = vadd.f32 %v302, %v405
    %v407 = vpop.f32.mrb[0].mxu0
    %408 = vdwg.mxu0
    %409 = vmatprep.subr.mxu0 0.0
    %v410 = vand.u32 %v47, 4294901760
    %411 = vmatpush1.msra.mxu0 %v410
    %412 = vmatprep.subr.mxu0 0.0
    %v413 = vand.u32 %v48, 4294901760
    %414 = vmatpush1.msra.mxu0 %v413
    %415 = vmatprep.subr.mxu0 0.0
    %v416 = vand.u32 %v49, 4294901760
    %417 = vmatpush1.msra.mxu0 %v416
    %418 = vmatprep.subr.mxu0 0.0
    %v419 = vand.u32 %v50, 4294901760
    %420 = vmatpush1.msra.mxu0 %v419
    %421 = vmatprep.subr.mxu0 0.0
    %v422 = vand.u32 %v51, 4294901760
    %423 = vmatpush1.msra.mxu0 %v422
    %424 = vmatprep.subr.mxu0 0.0
    %v425 = vand.u32 %v52, 4294901760
    %426 = vmatpush1.msra.mxu0 %v425
    %427 = vmatprep.subr.mxu0 0.0
    %v428 = vand.u32 %v53, 4294901760
    %429 = vmatpush1.msra.mxu0 %v428
    %430 = vmatprep.subr.mxu0 0.0
    %v431 = vand.u32 %v54, 4294901760
    %432 = vmatpush1.msra.mxu0 %v431
    %433 = vmatprep.subr.mxu0 0.0
    %v434 = vand.u32 %v55, 4294901760
    %435 = vmatpush1.msra.mxu0 %v434
    %436 = vmatprep.subr.mxu0 0.0
    %v437 = vand.u32 %v56, 4294901760
    %438 = vmatpush1.msra.mxu0 %v437
    %439 = vmatprep.subr.mxu0 0.0
    %v440 = vand.u32 %v57, 4294901760
    %441 = vmatpush1.msra.mxu0 %v440
    %442 = vmatprep.subr.mxu0 0.0
    %v443 = vand.u32 %v58, 4294901760
    %444 = vmatpush1.msra.mxu0 %v443
    %445 = vmatprep.subr.mxu0 0.0
    %v446 = vand.u32 %v59, 4294901760
    %447 = vmatpush1.msra.mxu0 %v446
    %448 = vmatprep.subr.mxu0 0.0
    %v449 = vand.u32 %v60, 4294901760
    %450 = vmatpush1.msra.mxu0 %v449
    %451 = vmatprep.subr.mxu0 0.0
    %v452 = vand.u32 %v61, 4294901760
    %453 = vmatpush1.msra.mxu0 %v452
    %454 = vmatprep.subr.mxu0 0.0
    %v455 = vand.u32 %v62, 4294901760
    %456 = vmatpush1.msra.mxu0 %v455
    %457 = vmatprep.subr.mxu0 0.0
    %458 = vmatpush1.msra.mxu0 0.0
    %459 = vmatprep.subr.mxu0 0.0
    %460 = vmatpush1.msra.mxu0 0.0
    %461 = vmatprep.subr.mxu0 0.0
    %462 = vmatpush1.msra.mxu0 0.0
    %463 = vmatprep.subr.mxu0 0.0
    %464 = vmatpush1.msra.mxu0 0.0
    %465 = vmatprep.subr.mxu0 0.0
    %466 = vmatpush1.msra.mxu0 0.0
    %467 = vmatprep.subr.mxu0 0.0
    %468 = vmatpush1.msra.mxu0 0.0
    %469 = vmatprep.subr.mxu0 0.0
    %470 = vmatpush1.msra.mxu0 0.0
    %471 = vmatprep.subr.mxu0 0.0
    %472 = vmatpush1.msra.mxu0 0.0
    %473 = vmatprep.subr.mxu0 0.0
    %474 = vmatpush1.msra.mxu0 0.0
    %475 = vmatprep.subr.mxu0 0.0
    %476 = vmatpush1.msra.mxu0 0.0
    %477 = vmatprep.subr.mxu0 0.0
    %478 = vmatpush1.msra.mxu0 0.0
    %479 = vmatprep.subr.mxu0 0.0
    %480 = vmatpush1.msra.mxu0 0.0
    %481 = vmatprep.subr.mxu0 0.0
    %482 = vmatpush1.msra.mxu0 0.0
    %483 = vmatprep.subr.mxu0 0.0
    %484 = vmatpush1.msra.mxu0 0.0
    %485 = vmatprep.subr.mxu0 0.0
    %486 = vmatpush1.msra.mxu0 0.0
    %487 = vmatprep.subr.mxu0 0.0
    %488 = vmatpush1.msra.mxu0 0.0
    %489 = vmatprep.mubr.f32.mxu0 0.0
    %v490 = vand.u32 %v46, 4294901760
    %v491 = vsub.f32 %v46, %v490
    %v492 = vand.u32 %v491, 4294901760
    %493 = vmatmul.mubr.f32.gmra.mrb[0].mxu0 %v492
    %v494 = vpop.f32.mrb[0].mxu0
    %v495 = vadd.f32 %v406, %v494
    %v496 = vpop.f32.mrb[0].mxu0
    %497 = vdwg.mxu0
    %498 = vmatprep.subr.mxu0 0.0
    %v499 = vand.u32 %v47, 4294901760
    %v500 = vsub.f32 %v47, %v499
    %v501 = vand.u32 %v500, 4294901760
    %502 = vmatpush1.msra.mxu0 %v501
    %503 = vmatprep.subr.mxu0 0.0
    %v504 = vand.u32 %v48, 4294901760
    %v505 = vsub.f32 %v48, %v504
    %v506 = vand.u32 %v505, 4294901760
    %507 = vmatpush1.msra.mxu0 %v506
    %508 = vmatprep.subr.mxu0 0.0
    %v509 = vand.u32 %v49, 4294901760
    %v510 = vsub.f32 %v49, %v509
    %v511 = vand.u32 %v510, 4294901760
    %512 = vmatpush1.msra.mxu0 %v511
    %513 = vmatprep.subr.mxu0 0.0
    %v514 = vand.u32 %v50, 4294901760
    %v515 = vsub.f32 %v50, %v514
    %v516 = vand.u32 %v515, 4294901760
    %517 = vmatpush1.msra.mxu0 %v516
    %518 = vmatprep.subr.mxu0 0.0
    %v519 = vand.u32 %v51, 4294901760
    %v520 = vsub.f32 %v51, %v519
    %v521 = vand.u32 %v520, 4294901760
    %522 = vmatpush1.msra.mxu0 %v521
    %523 = vmatprep.subr.mxu0 0.0
    %v524 = vand.u32 %v52, 4294901760
    %v525 = vsub.f32 %v52, %v524
    %v526 = vand.u32 %v525, 4294901760
    %527 = vmatpush1.msra.mxu0 %v526
    %528 = vmatprep.subr.mxu0 0.0
    %v529 = vand.u32 %v53, 4294901760
    %v530 = vsub.f32 %v53, %v529
    %v531 = vand.u32 %v530, 4294901760
    %532 = vmatpush1.msra.mxu0 %v531
    %533 = vmatprep.subr.mxu0 0.0
    %v534 = vand.u32 %v54, 4294901760
    %v535 = vsub.f32 %v54, %v534
    %v536 = vand.u32 %v535, 4294901760
    %537 = vmatpush1.msra.mxu0 %v536
    %538 = vmatprep.subr.mxu0 0.0
    %v539 = vand.u32 %v55, 4294901760
    %v540 = vsub.f32 %v55, %v539
    %v541 = vand.u32 %v540, 4294901760
    %542 = vmatpush1.msra.mxu0 %v541
    %543 = vmatprep.subr.mxu0 0.0
    %v544 = vand.u32 %v56, 4294901760
    %v545 = vsub.f32 %v56, %v544
    %v546 = vand.u32 %v545, 4294901760
    %547 = vmatpush1.msra.mxu0 %v546
    %548 = vmatprep.subr.mxu0 0.0
    %v549 = vand.u32 %v57, 4294901760
    %v550 = vsub.f32 %v57, %v549
    %v551 = vand.u32 %v550, 4294901760
    %552 = vmatpush1.msra.mxu0 %v551
    %553 = vmatprep.subr.mxu0 0.0
    %v554 = vand.u32 %v58, 4294901760
    %v555 = vsub.f32 %v58, %v554
    %v556 = vand.u32 %v555, 4294901760
    %557 = vmatpush1.msra.mxu0 %v556
    %558 = vmatprep.subr.mxu0 0.0
    %v559 = vand.u32 %v59, 4294901760
    %v560 = vsub.f32 %v59, %v559
    %v561 = vand.u32 %v560, 4294901760
    %562 = vmatpush1.msra.mxu0 %v561
    %563 = vmatprep.subr.mxu0 0.0
    %v564 = vand.u32 %v60, 4294901760
    %v565 = vsub.f32 %v60, %v564
    %v566 = vand.u32 %v565, 4294901760
    %567 = vmatpush1.msra.mxu0 %v566
    %568 = vmatprep.subr.mxu0 0.0
    %v569 = vand.u32 %v61, 4294901760
    %v570 = vsub.f32 %v61, %v569
    %v571 = vand.u32 %v570, 4294901760
    %572 = vmatpush1.msra.mxu0 %v571
    %573 = vmatprep.subr.mxu0 0.0
    %v574 = vand.u32 %v62, 4294901760
    %v575 = vsub.f32 %v62, %v574
    %v576 = vand.u32 %v575, 4294901760
    %577 = vmatpush1.msra.mxu0 %v576
    %578 = vmatprep.subr.mxu0 0.0
    %579 = vmatpush1.msra.mxu0 0.0
    %580 = vmatprep.subr.mxu0 0.0
    %581 = vmatpush1.msra.mxu0 0.0
    %582 = vmatprep.subr.mxu0 0.0
    %583 = vmatpush1.msra.mxu0 0.0
    %584 = vmatprep.subr.mxu0 0.0
    %585 = vmatpush1.msra.mxu0 0.0
    %586 = vmatprep.subr.mxu0 0.0
    %587 = vmatpush1.msra.mxu0 0.0
    %588 = vmatprep.subr.mxu0 0.0
    %589 = vmatpush1.msra.mxu0 0.0
    %590 = vmatprep.subr.mxu0 0.0
    %591 = vmatpush1.msra.mxu0 0.0
    %592 = vmatprep.subr.mxu0 0.0
    %593 = vmatpush1.msra.mxu0 0.0
    %594 = vmatprep.subr.mxu0 0.0
    %595 = vmatpush1.msra.mxu0 0.0
    %596 = vmatprep.subr.mxu0 0.0
    %597 = vmatpush1.msra.mxu0 0.0
    %598 = vmatprep.subr.mxu0 0.0
    %599 = vmatpush1.msra.mxu0 0.0
    %600 = vmatprep.subr.mxu0 0.0
    %601 = vmatpush1.msra.mxu0 0.0
    %602 = vmatprep.subr.mxu0 0.0
    %603 = vmatpush1.msra.mxu0 0.0
    %604 = vmatprep.subr.mxu0 0.0
    %605 = vmatpush1.msra.mxu0 0.0
    %606 = vmatprep.subr.mxu0 0.0
    %607 = vmatpush1.msra.mxu0 0.0
    %608 = vmatprep.subr.mxu0 0.0
    %609 = vmatpush1.msra.mxu0 0.0
    %610 = vmatprep.mubr.f32.mxu0 0.0
    %v611 = vand.u32 %v46, 4294901760
    %612 = vmatmul.mubr.f32.gmra.mrb[0].mxu0 %v611
    %v613 = vpop.f32.mrb[0].mxu0
    %v614 = vadd.f32 %v495, %v613
    %v615 = vpop.f32.mrb[0].mxu0
    %616 = vdwg.mxu0
    %617 = vmatprep.subr.mxu0 0.0
    %v618 = vand.u32 %v47, 4294901760
    %619 = vmatpush1.msra.mxu0 %v618
    %620 = vmatprep.subr.mxu0 0.0
    %v621 = vand.u32 %v48, 4294901760
    %622 = vmatpush1.msra.mxu0 %v621
    %623 = vmatprep.subr.mxu0 0.0
    %v624 = vand.u32 %v49, 4294901760
    %625 = vmatpush1.msra.mxu0 %v624
    %626 = vmatprep.subr.mxu0 0.0
    %v627 = vand.u32 %v50, 4294901760
    %628 = vmatpush1.msra.mxu0 %v627
    %629 = vmatprep.subr.mxu0 0.0
    %v630 = vand.u32 %v51, 4294901760
    %631 = vmatpush1.msra.mxu0 %v630
    %632 = vmatprep.subr.mxu0 0.0
    %v633 = vand.u32 %v52, 4294901760
    %634 = vmatpush1.msra.mxu0 %v633
    %635 = vmatprep.subr.mxu0 0.0
    %v636 = vand.u32 %v53, 4294901760
    %637 = vmatpush1.msra.mxu0 %v636
    %638 = vmatprep.subr.mxu0 0.0
    %v639 = vand.u32 %v54, 4294901760
    %640 = vmatpush1.msra.mxu0 %v639
    %641 = vmatprep.subr.mxu0 0.0
    %v642 = vand.u32 %v55, 4294901760
    %643 = vmatpush1.msra.mxu0 %v642
    %644 = vmatprep.subr.mxu0 0.0
    %v645 = vand.u32 %v56, 4294901760
    %646 = vmatpush1.msra.mxu0 %v645
    %647 = vmatprep.subr.mxu0 0.0
    %v648 = vand.u32 %v57, 4294901760
    %649 = vmatpush1.msra.mxu0 %v648
    %650 = vmatprep.subr.mxu0 0.0
    %v651 = vand.u32 %v58, 4294901760
    %652 = vmatpush1.msra.mxu0 %v651
    %653 = vmatprep.subr.mxu0 0.0
    %v654 = vand.u32 %v59, 4294901760
    %655 = vmatpush1.msra.mxu0 %v654
    %656 = vmatprep.subr.mxu0 0.0
    %v657 = vand.u32 %v60, 4294901760
    %658 = vmatpush1.msra.mxu0 %v657
    %659 = vmatprep.subr.mxu0 0.0
    %v660 = vand.u32 %v61, 4294901760
    %661 = vmatpush1.msra.mxu0 %v660
    %662 = vmatprep.subr.mxu0 0.0
    %v663 = vand.u32 %v62, 4294901760
    %664 = vmatpush1.msra.mxu0 %v663
    %665 = vmatprep.subr.mxu0 0.0
    %666 = vmatpush1.msra.mxu0 0.0
    %667 = vmatprep.subr.mxu0 0.0
    %668 = vmatpush1.msra.mxu0 0.0
    %669 = vmatprep.subr.mxu0 0.0
    %670 = vmatpush1.msra.mxu0 0.0
    %671 = vmatprep.subr.mxu0 0.0
    %672 = vmatpush1.msra.mxu0 0.0
    %673 = vmatprep.subr.mxu0 0.0
    %674 = vmatpush1.msra.mxu0 0.0
    %675 = vmatprep.subr.mxu0 0.0
    %676 = vmatpush1.msra.mxu0 0.0
    %677 = vmatprep.subr.mxu0 0.0
    %678 = vmatpush1.msra.mxu0 0.0
    %679 = vmatprep.subr.mxu0 0.0
    %680 = vmatpush1.msra.mxu0 0.0
    %681 = vmatprep.subr.mxu0 0.0
    %682 = vmatpush1.msra.mxu0 0.0
    %683 = vmatprep.subr.mxu0 0.0
    %684 = vmatpush1.msra.mxu0 0.0
    %685 = vmatprep.subr.mxu0 0.0
    %686 = vmatpush1.msra.mxu0 0.0
    %687 = vmatprep.subr.mxu0 0.0
    %688 = vmatpush1.msra.mxu0 0.0
    %689 = vmatprep.subr.mxu0 0.0
    %690 = vmatpush1.msra.mxu0 0.0
    %691 = vmatprep.subr.mxu0 0.0
    %692 = vmatpush1.msra.mxu0 0.0
    %693 = vmatprep.subr.mxu0 0.0
    %694 = vmatpush1.msra.mxu0 0.0
    %695 = vmatprep.subr.mxu0 0.0
    %696 = vmatpush1.msra.mxu0 0.0
    %697 = vmatprep.mubr.f32.mxu0 0.0
    %v698 = vand.u32 %v46, 4294901760
    %699 = vmatmul.mubr.f32.gmra.mrb[0].mxu0 %v698
    %v700 = vpop.f32.mrb[0].mxu0
    %v701 = vadd.f32 %v614, %v700
    %v702 = vpop.f32.mrb[0].mxu0
    %703 = vdwg.mxu0
    %v704 = vmul.f32 %v701, 0.03125
    %v705 = vsub.f32 %v46, %v704
    %v706 = vmul.f32 %v705, %v705
    %707 = vmatprep.subr.mxu0 0.0
    %v708 = vand.u32 %v47, 4294901760
    %709 = vmatpush1.msra.mxu0 %v708
    %710 = vmatprep.subr.mxu0 0.0
    %v711 = vand.u32 %v48, 4294901760
    %712 = vmatpush1.msra.mxu0 %v711
    %713 = vmatprep.subr.mxu0 0.0
    %v714 = vand.u32 %v49, 4294901760
    %715 = vmatpush1.msra.mxu0 %v714
    %716 = vmatprep.subr.mxu0 0.0
    %v717 = vand.u32 %v50, 4294901760
    %718 = vmatpush1.msra.mxu0 %v717
    %719 = vmatprep.subr.mxu0 0.0
    %v720 = vand.u32 %v51, 4294901760
    %721 = vmatpush1.msra.mxu0 %v720
    %722 = vmatprep.subr.mxu0 0.0
    %v723 = vand.u32 %v52, 4294901760
    %724 = vmatpush1.msra.mxu0 %v723
    %725 = vmatprep.subr.mxu0 0.0
    %v726 = vand.u32 %v53, 4294901760
    %727 = vmatpush1.msra.mxu0 %v726
    %728 = vmatprep.subr.mxu0 0.0
    %v729 = vand.u32 %v54, 4294901760
    %730 = vmatpush1.msra.mxu0 %v729
    %731 = vmatprep.subr.mxu0 0.0
    %v732 = vand.u32 %v55, 4294901760
    %733 = vmatpush1.msra.mxu0 %v732
    %734 = vmatprep.subr.mxu0 0.0
    %v735 = vand.u32 %v56, 4294901760
    %736 = vmatpush1.msra.mxu0 %v735
    %737 = vmatprep.subr.mxu0 0.0
    %v738 = vand.u32 %v57, 4294901760
    %739 = vmatpush1.msra.mxu0 %v738
    %740 = vmatprep.subr.mxu0 0.0
    %v741 = vand.u32 %v58, 4294901760
    %742 = vmatpush1.msra.mxu0 %v741
    %743 = vmatprep.subr.mxu0 0.0
    %v744 = vand.u32 %v59, 4294901760
    %745 = vmatpush1.msra.mxu0 %v744
    %746 = vmatprep.subr.mxu0 0.0
    %v747 = vand.u32 %v60, 4294901760
    %748 = vmatpush1.msra.mxu0 %v747
    %749 = vmatprep.subr.mxu0 0.0
    %v750 = vand.u32 %v61, 4294901760
    %751 = vmatpush1.msra.mxu0 %v750
    %752 = vmatprep.subr.mxu0 0.0
    %v753 = vand.u32 %v62, 4294901760
    %754 = vmatpush1.msra.mxu0 %v753
    %755 = vmatprep.subr.mxu0 0.0
    %756 = vmatpush1.msra.mxu0 0.0
    %757 = vmatprep.subr.mxu0 0.0
    %758 = vmatpush1.msra.mxu0 0.0
    %759 = vmatprep.subr.mxu0 0.0
    %760 = vmatpush1.msra.mxu0 0.0
    %761 = vmatprep.subr.mxu0 0.0
    %762 = vmatpush1.msra.mxu0 0.0
    %763 = vmatprep.subr.mxu0 0.0
    %764 = vmatpush1.msra.mxu0 0.0
    %765 = vmatprep.subr.mxu0 0.0
    %766 = vmatpush1.msra.mxu0 0.0
    %767 = vmatprep.subr.mxu0 0.0
    %768 = vmatpush1.msra.mxu0 0.0
    %769 = vmatprep.subr.mxu0 0.0
    %770 = vmatpush1.msra.mxu0 0.0
    %771 = vmatprep.subr.mxu0 0.0
    %772 = vmatpush1.msra.mxu0 0.0
    %773 = vmatprep.subr.mxu0 0.0
    %774 = vmatpush1.msra.mxu0 0.0
    %775 = vmatprep.subr.mxu0 0.0
    %776 = vmatpush1.msra.mxu0 0.0
    %777 = vmatprep.subr.mxu0 0.0
    %778 = vmatpush1.msra.mxu0 0.0
    %779 = vmatprep.subr.mxu0 0.0
    %780 = vmatpush1.msra.mxu0 0.0
    %781 = vmatprep.subr.mxu0 0.0
    %782 = vmatpush1.msra.mxu0 0.0
    %783 = vmatprep.subr.mxu0 0.0
    %784 = vmatpush1.msra.mxu0 0.0
    %785 = vmatprep.subr.mxu0 0.0
    %786 = vmatpush1.msra.mxu0 0.0
    %787 = vmatprep.mubr.f32.mxu0 0.0
    %v788 = vand.u32 %v706, 4294901760
    %v789 = vsub.f32 %v706, %v788
    %v790 = vand.u32 %v789, 4294901760
    %v791 = vsub.f32 %v789, %v790
    %v792 = vand.u32 %v791, 4294901760
    %793 = vmatmul.mubr.f32.gmra.mrb[0].mxu0 %v792
    %v794 = vpop.f32.mrb[0].mxu0
    %v795 = vadd.f32 0.0, %v794
    %v796 = vpop.f32.mrb[0].mxu0
    %797 = vdwg.mxu0
    %798 = vmatprep.subr.mxu0 0.0
    %v799 = vand.u32 %v47, 4294901760
    %v800 = vsub.f32 %v47, %v799
    %v801 = vand.u32 %v800, 4294901760
    %v802 = vsub.f32 %v800, %v801
    %v803 = vand.u32 %v802, 4294901760
    %804 = vmatpush1.msra.mxu0 %v803
    %805 = vmatprep.subr.mxu0 0.0
    %v806 = vand.u32 %v48, 4294901760
    %v807 = vsub.f32 %v48, %v806
    %v808 = vand.u32 %v807, 4294901760
    %v809 = vsub.f32 %v807, %v808
    %v810 = vand.u32 %v809, 4294901760
    %811 = vmatpush1.msra.mxu0 %v810
    %812 = vmatprep.subr.mxu0 0.0
    %v813 = vand.u32 %v49, 4294901760
    %v814 = vsub.f32 %v49, %v813
    %v815 = vand.u32 %v814, 4294901760
    %v816 = vsub.f32 %v814, %v815
    %v817 = vand.u32 %v816, 4294901760
    %818 = vmatpush1.msra.mxu0 %v817
    %819 = vmatprep.subr.mxu0 0.0
    %v820 = vand.u32 %v50, 4294901760
    %v821 = vsub.f32 %v50, %v820
    %v822 = vand.u32 %v821, 4294901760
    %v823 = vsub.f32 %v821, %v822
    %v824 = vand.u32 %v823, 4294901760
    %825 = vmatpush1.msra.mxu0 %v824
    %826 = vmatprep.subr.mxu0 0.0
    %v827 = vand.u32 %v51, 4294901760
    %v828 = vsub.f32 %v51, %v827
    %v829 = vand.u32 %v828, 4294901760
    %v830 = vsub.f32 %v828, %v829
    %v831 = vand.u32 %v830, 4294901760
    %832 = vmatpush1.msra.mxu0 %v831
    %833 = vmatprep.subr.mxu0 0.0
    %v834 = vand.u32 %v52, 4294901760
    %v835 = vsub.f32 %v52, %v834
    %v836 = vand.u32 %v835, 4294901760
    %v837 = vsub.f32 %v835, %v836
    %v838 = vand.u32 %v837, 4294901760
    %839 = vmatpush1.msra.mxu0 %v838
    %840 = vmatprep.subr.mxu0 0.0
    %v841 = vand.u32 %v53, 4294901760
    %v842 = vsub.f32 %v53, %v841
    %v843 = vand.u32 %v842, 4294901760
    %v844 = vsub.f32 %v842, %v843
    %v845 = vand.u32 %v844, 4294901760
    %846 = vmatpush1.msra.mxu0 %v845
    %847 = vmatprep.subr.mxu0 0.0
    %v848 = vand.u32 %v54, 4294901760
    %v849 = vsub.f32 %v54, %v848
    %v850 = vand.u32 %v849, 4294901760
    %v851 = vsub.f32 %v849, %v850
    %v852 = vand.u32 %v851, 4294901760
    %853 = vmatpush1.msra.mxu0 %v852
    %854 = vmatprep.subr.mxu0 0.0
    %v855 = vand.u32 %v55, 4294901760
    %v856 = vsub.f32 %v55, %v855
    %v857 = vand.u32 %v856, 4294901760
    %v858 = vsub.f32 %v856, %v857
    %v859 = vand.u32 %v858, 4294901760
    %860 = vmatpush1.msra.mxu0 %v859
    %861 = vmatprep.subr.mxu0 0.0
    %v862 = vand.u32 %v56, 4294901760
    %v863 = vsub.f32 %v56, %v862
    %v864 = vand.u32 %v863, 4294901760
    %v865 = vsub.f32 %v863, %v864
    %v866 = vand.u32 %v865, 4294901760
    %867 = vmatpush1.msra.mxu0 %v866
    %868 = vmatprep.subr.mxu0 0.0
    %v869 = vand.u32 %v57, 4294901760
    %v870 = vsub.f32 %v57, %v869
    %v871 = vand.u32 %v870, 4294901760
    %v872 = vsub.f32 %v870, %v871
    %v873 = vand.u32 %v872, 4294901760
    %874 = vmatpush1.msra.mxu0 %v873
    %875 = vmatprep.subr.mxu0 0.0
    %v876 = vand.u32 %v58, 4294901760
    %v877 = vsub.f32 %v58, %v876
    %v878 = vand.u32 %v877, 4294901760
    %v879 = vsub.f32 %v877, %v878
    %v880 = vand.u32 %v879, 4294901760
    %881 = vmatpush1.msra.mxu0 %v880
    %882 = vmatprep.subr.mxu0 0.0
    %v883 = vand.u32 %v59, 4294901760
    %v884 = vsub.f32 %v59, %v883
    %v885 = vand.u32 %v884, 4294901760
    %v886 = vsub.f32 %v884, %v885
    %v887 = vand.u32 %v886, 4294901760
    %888 = vmatpush1.msra.mxu0 %v887
    %889 = vmatprep.subr.mxu0 0.0
    %v890 = vand.u32 %v60, 4294901760
    %v891 = vsub.f32 %v60, %v890
    %v892 = vand.u32 %v891, 4294901760
    %v893 = vsub.f32 %v891, %v892
    %v894 = vand.u32 %v893, 4294901760
    %895 = vmatpush1.msra.mxu0 %v894
    %896 = vmatprep.subr.mxu0 0.0
    %v897 = vand.u32 %v61, 4294901760
    %v898 = vsub.f32 %v61, %v897
    %v899 = vand.u32 %v898, 4294901760
    %v900 = vsub.f32 %v898, %v899
    %v901 = vand.u32 %v900, 4294901760
    %902 = vmatpush1.msra.mxu0 %v901
    %903 = vmatprep.subr.mxu0 0.0
    %v904 = vand.u32 %v62, 4294901760
    %v905 = vsub.f32 %v62, %v904
    %v906 = vand.u32 %v905, 4294901760
    %v907 = vsub.f32 %v905, %v906
    %v908 = vand.u32 %v907, 4294901760
    %909 = vmatpush1.msra.mxu0 %v908
    %910 = vmatprep.subr.mxu0 0.0
    %911 = vmatpush1.msra.mxu0 0.0
    %912 = vmatprep.subr.mxu0 0.0
    %913 = vmatpush1.msra.mxu0 0.0
    %914 = vmatprep.subr.mxu0 0.0
    %915 = vmatpush1.msra.mxu0 0.0
    %916 = vmatprep.subr.mxu0 0.0
    %917 = vmatpush1.msra.mxu0 0.0
    %918 = vmatprep.subr.mxu0 0.0
    %919 = vmatpush1.msra.mxu0 0.0
    %920 = vmatprep.subr.mxu0 0.0
    %921 = vmatpush1.msra.mxu0 0.0
    %922 = vmatprep.subr.mxu0 0.0
    %923 = vmatpush1.msra.mxu0 0.0
    %924 = vmatprep.subr.mxu0 0.0
    %925 = vmatpush1.msra.mxu0 0.0
    %926 = vmatprep.subr.mxu0 0.0
    %927 = vmatpush1.msra.mxu0 0.0
    %928 = vmatprep.subr.mxu0 0.0
    %929 = vmatpush1.msra.mxu0 0.0
    %930 = vmatprep.subr.mxu0 0.0
    %931 = vmatpush1.msra.mxu0 0.0
    %932 = vmatprep.subr.mxu0 0.0
    %933 = vmatpush1.msra.mxu0 0.0
    %934 = vmatprep.subr.mxu0 0.0
    %935 = vmatpush1.msra.mxu0 0.0
    %936 = vmatprep.subr.mxu0 0.0
    %937 = vmatpush1.msra.mxu0 0.0
    %938 = vmatprep.subr.mxu0 0.0
    %939 = vmatpush1.msra.mxu0 0.0
    %940 = vmatprep.subr.mxu0 0.0
    %941 = vmatpush1.msra.mxu0 0.0
    %942 = vmatprep.mubr.f32.mxu0 0.0
    %v943 = vand.u32 %v706, 4294901760
    %944 = vmatmul.mubr.f32.gmra.mrb[0].mxu0 %v943
    %v945 = vpop.f32.mrb[0].mxu0
    %v946 = vadd.f32 %v795, %v945
    %v947 = vpop.f32.mrb[0].mxu0
    %948 = vdwg.mxu0
    %949 = vmatprep.subr.mxu0 0.0
    %v950 = vand.u32 %v47, 4294901760
    %v951 = vsub.f32 %v47, %v950
    %952 = vmatpush1.msra.mxu0 %v951
    %953 = vmatprep.subr.mxu0 0.0
    %v954 = vand.u32 %v48, 4294901760
    %v955 = vsub.f32 %v48, %v954
    %956 = vmatpush1.msra.mxu0 %v955
    %957 = vmatprep.subr.mxu0 0.0
    %v958 = vand.u32 %v49, 4294901760
    %v959 = vsub.f32 %v49, %v958
    %960 = vmatpush1.msra.mxu0 %v959
    %961 = vmatprep.subr.mxu0 0.0
    %v962 = vand.u32 %v50, 4294901760
    %v963 = vsub.f32 %v50, %v962
    %964 = vmatpush1.msra.mxu0 %v963
    %965 = vmatprep.subr.mxu0 0.0
    %v966 = vand.u32 %v51, 4294901760
    %v967 = vsub.f32 %v51, %v966
    %968 = vmatpush1.msra.mxu0 %v967
    %969 = vmatprep.subr.mxu0 0.0
    %v970 = vand.u32 %v52, 4294901760
    %v971 = vsub.f32 %v52, %v970
    %972 = vmatpush1.msra.mxu0 %v971
    %973 = vmatprep.subr.mxu0 0.0
    %v974 = vand.u32 %v53, 4294901760
    %v975 = vsub.f32 %v53, %v974
    %976 = vmatpush1.msra.mxu0 %v975
    %977 = vmatprep.subr.mxu0 0.0
    %v978 = vand.u32 %v54, 4294901760
    %v979 = vsub.f32 %v54, %v978
    %980 = vmatpush1.msra.mxu0 %v979
    %981 = vmatprep.subr.mxu0 0.0
    %v982 = vand.u32 %v55, 4294901760
    %v983 = vsub.f32 %v55, %v982
    %984 = vmatpush1.msra.mxu0 %v983
    %985 = vmatprep.subr.mxu0 0.0
    %v986 = vand.u32 %v56, 4294901760
    %v987 = vsub.f32 %v56, %v986
    %988 = vmatpush1.msra.mxu0 %v987
    %989 = vmatprep.subr.mxu0 0.0
    %v990 = vand.u32 %v57, 4294901760
    %v991 = vsub.f32 %v57, %v990
    %992 = vmatpush1.msra.mxu0 %v991
    %993 = vmatprep.subr.mxu0 0.0
    %v994 = vand.u32 %v58, 4294901760
    %v995 = vsub.f32 %v58, %v994
    %996 = vmatpush1.msra.mxu0 %v995
    %997 = vmatprep.subr.mxu0 0.0
    %v998 = vand.u32 %v59, 4294901760
    %v999 = vsub.f32 %v59, %v998
    %1000 = vmatpush1.msra.mxu0 %v999
    %1001 = vmatprep.subr.mxu0 0.0
    %v1002 = vand.u32 %v60, 4294901760
    %v1003 = vsub.f32 %v60, %v1002
    %1004 = vmatpush1.msra.mxu0 %v1003
    %1005 = vmatprep.subr.mxu0 0.0
    %v1006 = vand.u32 %v61, 4294901760
    %v1007 = vsub.f32 %v61, %v1006
    %1008 = vmatpush1.msra.mxu0 %v1007
    %1009 = vmatprep.subr.mxu0 0.0
    %v1010 = vand.u32 %v62, 4294901760
    %v1011 = vsub.f32 %v62, %v1010
    %1012 = vmatpush1.msra.mxu0 %v1011
    %1013 = vmatprep.subr.mxu0 0.0
    %1014 = vmatpush1.msra.mxu0 0.0
    %1015 = vmatprep.subr.mxu0 0.0
    %1016 = vmatpush1.msra.mxu0 0.0
    %1017 = vmatprep.subr.mxu0 0.0
    %1018 = vmatpush1.msra.mxu0 0.0
    %1019 = vmatprep.subr.mxu0 0.0
    %1020 = vmatpush1.msra.mxu0 0.0
    %1021 = vmatprep.subr.mxu0 0.0
    %1022 = vmatpush1.msra.mxu0 0.0
    %1023 = vmatprep.subr.mxu0 0.0
    %1024 = vmatpush1.msra.mxu0 0.0
    %1025 = vmatprep.subr.mxu0 0.0
    %1026 = vmatpush1.msra.mxu0 0.0
    %1027 = vmatprep.subr.mxu0 0.0
    %1028 = vmatpush1.msra.mxu0 0.0
    %1029 = vmatprep.subr.mxu0 0.0
    %1030 = vmatpush1.msra.mxu0 0.0
    %1031 = vmatprep.subr.mxu0 0.0
    %1032 = vmatpush1.msra.mxu0 0.0
    %1033 = vmatprep.subr.mxu0 0.0
    %1034 = vmatpush1.msra.mxu0 0.0
    %1035 = vmatprep.subr.mxu0 0.0
    %1036 = vmatpush1.msra.mxu0 0.0
    %1037 = vmatprep.subr.mxu0 0.0
    %1038 = vmatpush1.msra.mxu0 0.0
    %1039 = vmatprep.subr.mxu0 0.0
    %1040 = vmatpush1.msra.mxu0 0.0
    %1041 = vmatprep.subr.mxu0 0.0
    %1042 = vmatpush1.msra.mxu0 0.0
    %1043 = vmatprep.subr.mxu0 0.0
    %1044 = vmatpush1.msra.mxu0 0.0
    %1045 = vmatprep.mubr.f32.mxu0 0.0
    %v1046 = vand.u32 %v706, 4294901760
    %v1047 = vsub.f32 %v706, %v1046
    %1048 = vmatmul.mubr.f32.gmra.mrb[0].mxu0 %v1047
    %v1049 = vpop.f32.mrb[0].mxu0
    %v1050 = vadd.f32 %v946, %v1049
    %v1051 = vpop.f32.mrb[0].mxu0
    %1052 = vdwg.mxu0
    %1053 = vmatprep.subr.mxu0 0.0
    %v1054 = vand.u32 %v47, 4294901760
    %1055 = vmatpush1.msra.mxu0 %v1054
    %1056 = vmatprep.subr.mxu0 0.0
    %v1057 = vand.u32 %v48, 4294901760
    %1058 = vmatpush1.msra.mxu0 %v1057
    %1059 = vmatprep.subr.mxu0 0.0
    %v1060 = vand.u32 %v49, 4294901760
    %1061 = vmatpush1.msra.mxu0 %v1060
    %1062 = vmatprep.subr.mxu0 0.0
    %v1063 = vand.u32 %v50, 4294901760
    %1064 = vmatpush1.msra.mxu0 %v1063
    %1065 = vmatprep.subr.mxu0 0.0
    %v1066 = vand.u32 %v51, 4294901760
    %1067 = vmatpush1.msra.mxu0 %v1066
    %1068 = vmatprep.subr.mxu0 0.0
    %v1069 = vand.u32 %v52, 4294901760
    %1070 = vmatpush1.msra.mxu0 %v1069
    %1071 = vmatprep.subr.mxu0 0.0
    %v1072 = vand.u32 %v53, 4294901760
    %1073 = vmatpush1.msra.mxu0 %v1072
    %1074 = vmatprep.subr.mxu0 0.0
    %v1075 = vand.u32 %v54, 4294901760
    %1076 = vmatpush1.msra.mxu0 %v1075
    %1077 = vmatprep.subr.mxu0 0.0
    %v1078 = vand.u32 %v55, 4294901760
    %1079 = vmatpush1.msra.mxu0 %v1078
    %1080 = vmatprep.subr.mxu0 0.0
    %v1081 = vand.u32 %v56, 4294901760
    %1082 = vmatpush1.msra.mxu0 %v1081
    %1083 = vmatprep.subr.mxu0 0.0
    %v1084 = vand.u32 %v57, 4294901760
    %1085 = vmatpush1.msra.mxu0 %v1084
    %1086 = vmatprep.subr.mxu0 0.0
    %v1087 = vand.u32 %v58, 4294901760
    %1088 = vmatpush1.msra.mxu0 %v1087
    %1089 = vmatprep.subr.mxu0 0.0
    %v1090 = vand.u32 %v59, 4294901760
    %1091 = vmatpush1.msra.mxu0 %v1090
    %1092 = vmatprep.subr.mxu0 0.0
    %v1093 = vand.u32 %v60, 4294901760
    %1094 = vmatpush1.msra.mxu0 %v1093
    %1095 = vmatprep.subr.mxu0 0.0
    %v1096 = vand.u32 %v61, 4294901760
    %1097 = vmatpush1.msra.mxu0 %v1096
    %1098 = vmatprep.subr.mxu0 0.0
    %v1099 = vand.u32 %v62, 4294901760
    %1100 = vmatpush1.msra.mxu0 %v1099
    %1101 = vmatprep.subr.mxu0 0.0
    %1102 = vmatpush1.msra.mxu0 0.0
    %1103 = vmatprep.subr.mxu0 0.0
    %1104 = vmatpush1.msra.mxu0 0.0
    %1105 = vmatprep.subr.mxu0 0.0
    %1106 = vmatpush1.msra.mxu0 0.0
    %1107 = vmatprep.subr.mxu0 0.0
    %1108 = vmatpush1.msra.mxu0 0.0
    %1109 = vmatprep.subr.mxu0 0.0
    %1110 = vmatpush1.msra.mxu0 0.0
    %1111 = vmatprep.subr.mxu0 0.0
    %1112 = vmatpush1.msra.mxu0 0.0
    %1113 = vmatprep.subr.mxu0 0.0
    %1114 = vmatpush1.msra.mxu0 0.0
    %1115 = vmatprep.subr.mxu0 0.0
    %1116 = vmatpush1.msra.mxu0 0.0
    %1117 = vmatprep.subr.mxu0 0.0
    %1118 = vmatpush1.msra.mxu0 0.0
    %1119 = vmatprep.subr.mxu0 0.0
    %1120 = vmatpush1.msra.mxu0 0.0
    %1121 = vmatprep.subr.mxu0 0.0
    %1122 = vmatpush1.msra.mxu0 0.0
    %1123 = vmatprep.subr.mxu0 0.0
    %1124 = vmatpush1.msra.mxu0 0.0
    %1125 = vmatprep.subr.mxu0 0.0
    %1126 = vmatpush1.msra.mxu0 0.0
    %1127 = vmatprep.subr.mxu0 0.0
    %1128 = vmatpush1.msra.mxu0 0.0
    %1129 = vmatprep.subr.mxu0 0.0
    %1130 = vmatpush1.msra.mxu0 0.0
    %1131 = vmatprep.subr.mxu0 0.0
    %1132 = vmatpush1.msra.mxu0 0.0
    %1133 = vmatprep.mubr.f32.mxu0 0.0
    %v1134 = vand.u32 %v706, 4294901760
    %v1135 = vsub.f32 %v706, %v1134
    %v1136 = vand.u32 %v1135, 4294901760
    %1137 = vmatmul.mubr.f32.gmra.mrb[0].mxu0 %v1136
    %v1138 = vpop.f32.mrb[0].mxu0
    %v1139 = vadd.f32 %v1050, %v1138
    %v1140 = vpop.f32.mrb[0].mxu0
    %1141 = vdwg.mxu0
    %1142 = vmatprep.subr.mxu0 0.0
    %v1143 = vand.u32 %v47, 4294901760
    %v1144 = vsub.f32 %v47, %v1143
    %v1145 = vand.u32 %v1144, 4294901760
    %1146 = vmatpush1.msra.mxu0 %v1145
    %1147 = vmatprep.subr.mxu0 0.0
    %v1148 = vand.u32 %v48, 4294901760
    %v1149 = vsub.f32 %v48, %v1148
    %v1150 = vand.u32 %v1149, 4294901760
    %1151 = vmatpush1.msra.mxu0 %v1150
    %1152 = vmatprep.subr.mxu0 0.0
    %v1153 = vand.u32 %v49, 4294901760
    %v1154 = vsub.f32 %v49, %v1153
    %v1155 = vand.u32 %v1154, 4294901760
    %1156 = vmatpush1.msra.mxu0 %v1155
    %1157 = vmatprep.subr.mxu0 0.0
    %v1158 = vand.u32 %v50, 4294901760
    %v1159 = vsub.f32 %v50, %v1158
    %v1160 = vand.u32 %v1159, 4294901760
    %1161 = vmatpush1.msra.mxu0 %v1160
    %1162 = vmatprep.subr.mxu0 0.0
    %v1163 = vand.u32 %v51, 4294901760
    %v1164 = vsub.f32 %v51, %v1163
    %v1165 = vand.u32 %v1164, 4294901760
    %1166 = vmatpush1.msra.mxu0 %v1165
    %1167 = vmatprep.subr.mxu0 0.0
    %v1168 = vand.u32 %v52, 4294901760
    %v1169 = vsub.f32 %v52, %v1168
    %v1170 = vand.u32 %v1169, 4294901760
    %1171 = vmatpush1.msra.mxu0 %v1170
    %1172 = vmatprep.subr.mxu0 0.0
    %v1173 = vand.u32 %v53, 4294901760
    %v1174 = vsub.f32 %v53, %v1173
    %v1175 = vand.u32 %v1174, 4294901760
    %1176 = vmatpush1.msra.mxu0 %v1175
    %1177 = vmatprep.subr.mxu0 0.0
    %v1178 = vand.u32 %v54, 4294901760
    %v1179 = vsub.f32 %v54, %v1178
    %v1180 = vand.u32 %v1179, 4294901760
    %1181 = vmatpush1.msra.mxu0 %v1180
    %1182 = vmatprep.subr.mxu0 0.0
    %v1183 = vand.u32 %v55, 4294901760
    %v1184 = vsub.f32 %v55, %v1183
    %v1185 = vand.u32 %v1184, 4294901760
    %1186 = vmatpush1.msra.mxu0 %v1185
    %1187 = vmatprep.subr.mxu0 0.0
    %v1188 = vand.u32 %v56, 4294901760
    %v1189 = vsub.f32 %v56, %v1188
    %v1190 = vand.u32 %v1189, 4294901760
    %1191 = vmatpush1.msra.mxu0 %v1190
    %1192 = vmatprep.subr.mxu0 0.0
    %v1193 = vand.u32 %v57, 4294901760
    %v1194 = vsub.f32 %v57, %v1193
    %v1195 = vand.u32 %v1194, 4294901760
    %1196 = vmatpush1.msra.mxu0 %v1195
    %1197 = vmatprep.subr.mxu0 0.0
    %v1198 = vand.u32 %v58, 4294901760
    %v1199 = vsub.f32 %v58, %v1198
    %v1200 = vand.u32 %v1199, 4294901760
    %1201 = vmatpush1.msra.mxu0 %v1200
    %1202 = vmatprep.subr.mxu0 0.0
    %v1203 = vand.u32 %v59, 4294901760
    %v1204 = vsub.f32 %v59, %v1203
    %v1205 = vand.u32 %v1204, 4294901760
    %1206 = vmatpush1.msra.mxu0 %v1205
    %1207 = vmatprep.subr.mxu0 0.0
    %v1208 = vand.u32 %v60, 4294901760
    %v1209 = vsub.f32 %v60, %v1208
    %v1210 = vand.u32 %v1209, 4294901760
    %1211 = vmatpush1.msra.mxu0 %v1210
    %1212 = vmatprep.subr.mxu0 0.0
    %v1213 = vand.u32 %v61, 4294901760
    %v1214 = vsub.f32 %v61, %v1213
    %v1215 = vand.u32 %v1214, 4294901760
    %1216 = vmatpush1.msra.mxu0 %v1215
    %1217 = vmatprep.subr.mxu0 0.0
    %v1218 = vand.u32 %v62, 4294901760
    %v1219 = vsub.f32 %v62, %v1218
    %v1220 = vand.u32 %v1219, 4294901760
    %1221 = vmatpush1.msra.mxu0 %v1220
    %1222 = vmatprep.subr.mxu0 0.0
    %1223 = vmatpush1.msra.mxu0 0.0
    %1224 = vmatprep.subr.mxu0 0.0
    %1225 = vmatpush1.msra.mxu0 0.0
    %1226 = vmatprep.subr.mxu0 0.0
    %1227 = vmatpush1.msra.mxu0 0.0
    %1228 = vmatprep.subr.mxu0 0.0
    %1229 = vmatpush1.msra.mxu0 0.0
    %1230 = vmatprep.subr.mxu0 0.0
    %1231 = vmatpush1.msra.mxu0 0.0
    %1232 = vmatprep.subr.mxu0 0.0
    %1233 = vmatpush1.msra.mxu0 0.0
    %1234 = vmatprep.subr.mxu0 0.0
    %1235 = vmatpush1.msra.mxu0 0.0
    %1236 = vmatprep.subr.mxu0 0.0
    %1237 = vmatpush1.msra.mxu0 0.0
    %1238 = vmatprep.subr.mxu0 0.0
    %1239 = vmatpush1.msra.mxu0 0.0
    %1240 = vmatprep.subr.mxu0 0.0
    %1241 = vmatpush1.msra.mxu0 0.0
    %1242 = vmatprep.subr.mxu0 0.0
    %1243 = vmatpush1.msra.mxu0 0.0
    %1244 = vmatprep.subr.mxu0 0.0
    %1245 = vmatpush1.msra.mxu0 0.0
    %1246 = vmatprep.subr.mxu0 0.0
    %1247 = vmatpush1.msra.mxu0 0.0
    %1248 = vmatprep.subr.mxu0 0.0
    %1249 = vmatpush1.msra.mxu0 0.0
    %1250 = vmatprep.subr.mxu0 0.0
    %1251 = vmatpush1.msra.mxu0 0.0
    %1252 = vmatprep.subr.mxu0 0.0
    %1253 = vmatpush1.msra.mxu0 0.0
    %1254 = vmatprep.mubr.f32.mxu0 0.0
    %v1255 = vand.u32 %v706, 4294901760
    %1256 = vmatmul.mubr.f32.gmra.mrb[0].mxu0 %v1255
    %v1257 = vpop.f32.mrb[0].mxu0
    %v1258 = vadd.f32 %v1139, %v1257
    %v1259 = vpop.f32.mrb[0].mxu0
    %1260 = vdwg.mxu0
    %1261 = vmatprep.subr.mxu0 0.0
    %v1262 = vand.u32 %v47, 4294901760
    %1263 = vmatpush1.msra.mxu0 %v1262
    %1264 = vmatprep.subr.mxu0 0.0
    %v1265 = vand.u32 %v48, 4294901760
    %1266 = vmatpush1.msra.mxu0 %v1265
    %1267 = vmatprep.subr.mxu0 0.0
    %v1268 = vand.u32 %v49, 4294901760
    %1269 = vmatpush1.msra.mxu0 %v1268
    %1270 = vmatprep.subr.mxu0 0.0
    %v1271 = vand.u32 %v50, 4294901760
    %1272 = vmatpush1.msra.mxu0 %v1271
    %1273 = vmatprep.subr.mxu0 0.0
    %v1274 = vand.u32 %v51, 4294901760
    %1275 = vmatpush1.msra.mxu0 %v1274
    %1276 = vmatprep.subr.mxu0 0.0
    %v1277 = vand.u32 %v52, 4294901760
    %1278 = vmatpush1.msra.mxu0 %v1277
    %1279 = vmatprep.subr.mxu0 0.0
    %v1280 = vand.u32 %v53, 4294901760
    %1281 = vmatpush1.msra.mxu0 %v1280
    %1282 = vmatprep.subr.mxu0 0.0
    %v1283 = vand.u32 %v54, 4294901760
    %1284 = vmatpush1.msra.mxu0 %v1283
    %1285 = vmatprep.subr.mxu0 0.0
    %v1286 = vand.u32 %v55, 4294901760
    %1287 = vmatpush1.msra.mxu0 %v1286
    %1288 = vmatprep.subr.mxu0 0.0
    %v1289 = vand.u32 %v56, 4294901760
    %1290 = vmatpush1.msra.mxu0 %v1289
    %1291 = vmatprep.subr.mxu0 0.0
    %v1292 = vand.u32 %v57, 4294901760
    %1293 = vmatpush1.msra.mxu0 %v1292
    %1294 = vmatprep.subr.mxu0 0.0
    %v1295 = vand.u32 %v58, 4294901760
    %1296 = vmatpush1.msra.mxu0 %v1295
    %1297 = vmatprep.subr.mxu0 0.0
    %v1298 = vand.u32 %v59, 4294901760
    %1299 = vmatpush1.msra.mxu0 %v1298
    %1300 = vmatprep.subr.mxu0 0.0
    %v1301 = vand.u32 %v60, 4294901760
    %1302 = vmatpush1.msra.mxu0 %v1301
    %1303 = vmatprep.subr.mxu0 0.0
    %v1304 = vand.u32 %v61, 4294901760
    %1305 = vmatpush1.msra.mxu0 %v1304
    %1306 = vmatprep.subr.mxu0 0.0
    %v1307 = vand.u32 %v62, 4294901760
    %1308 = vmatpush1.msra.mxu0 %v1307
    %1309 = vmatprep.subr.mxu0 0.0
    %1310 = vmatpush1.msra.mxu0 0.0
    %1311 = vmatprep.subr.mxu0 0.0
    %1312 = vmatpush1.msra.mxu0 0.0
    %1313 = vmatprep.subr.mxu0 0.0
    %1314 = vmatpush1.msra.mxu0 0.0
    %1315 = vmatprep.subr.mxu0 0.0
    %1316 = vmatpush1.msra.mxu0 0.0
    %1317 = vmatprep.subr.mxu0 0.0
    %1318 = vmatpush1.msra.mxu0 0.0
    %1319 = vmatprep.subr.mxu0 0.0
    %1320 = vmatpush1.msra.mxu0 0.0
    %1321 = vmatprep.subr.mxu0 0.0
    %1322 = vmatpush1.msra.mxu0 0.0
    %1323 = vmatprep.subr.mxu0 0.0
    %1324 = vmatpush1.msra.mxu0 0.0
    %1325 = vmatprep.subr.mxu0 0.0
    %1326 = vmatpush1.msra.mxu0 0.0
    %1327 = vmatprep.subr.mxu0 0.0
    %1328 = vmatpush1.msra.mxu0 0.0
    %1329 = vmatprep.subr.mxu0 0.0
    %1330 = vmatpush1.msra.mxu0 0.0
    %1331 = vmatprep.subr.mxu0 0.0
    %1332 = vmatpush1.msra.mxu0 0.0
    %1333 = vmatprep.subr.mxu0 0.0
    %1334 = vmatpush1.msra.mxu0 0.0
    %1335 = vmatprep.subr.mxu0 0.0
    %1336 = vmatpush1.msra.mxu0 0.0
    %1337 = vmatprep.subr.mxu0 0.0
    %1338 = vmatpush1.msra.mxu0 0.0
    %1339 = vmatprep.subr.mxu0 0.0
    %1340 = vmatpush1.msra.mxu0 0.0
    %1341 = vmatprep.mubr.f32.mxu0 0.0
    %v1342 = vand.u32 %v706, 4294901760
    %1343 = vmatmul.mubr.f32.gmra.mrb[0].mxu0 %v1342
    %v1344 = vpop.f32.mrb[0].mxu0
    %v1345 = vadd.f32 %v1258, %v1344
    %v1346 = vpop.f32.mrb[0].mxu0
    %1347 = vdwg.mxu0
    %v1348 = vmul.f32 %v1345, 0.032258064
    %v1349 = vrsqrt.pop %v1348
    %v1350 = vmul.f32 %v1348, %v1349
    %vm1351 = vcmp.eq.f32.partialorder %v1348, inf
    %v1352 = vsel %vm1351, %v1348, %v1350
    %vm1353 = vcmp.eq.f32.partialorder %v1348, 0.0
    %v1354 = vand.u32 %v1348, 2147483648
    %v1355 = vsel %vm1353, %v1354, %v1352
    %v1356 = vadd.f32 %v1355, 1e-05
    %v1357 = vrcp.pop %v1356
    %v1358 = vmul.f32 %v705, %v1357
    %v1359 = vld [vmem:[%s1] sm:$0x1]
    %v1361 = vlaneseq
    %v1362 = vshrl.u32 %v1361, 7
    %v1363 = vsub.s32 0, %v1362
    %v1364 = vrot.slane %v1359, %v1363
    %v1366 = vmul.f32 %v1358, %v1364
    %v1367 = vld [vmem:[%s2] sm:$0x1]
    %v1369 = vlaneseq
    %v1370 = vshrl.u32 %v1369, 7
    %v1371 = vsub.s32 0, %v1370
    %v1372 = vrot.slane %v1367, %v1371
    %v1374 = vadd.f32 %v1366, %v1372
    %1375 = vst [vmem:[#allocation7] sm:$0xff] %v1374
    // Predicated region
    $region26: #{tpu_custom_call.1} parent=1 // pred_check
      _
    $region27: #{tpu_custom_call.1} parent=1 // pred_check_branch
      %1377 = sbr.rel (0) target = $region29
    $region28: #{tpu_custom_call.1} parent=1 // pred_region
      %s1379 = ssub.s32 128, 64
      %1380 = vsyncadd [#allocation4], %s1379
      %s1381 = sshll.u32 [#allocation7], 4
      %s1382 = int_to_ptr.vmem [resolvable:$true] %s1381
      %1387 = dma.vmem_to_hbm [thread:$0]  %s1382, 64, %s4, [#allocation4], 64, 64, 4
    $region29: #{tpu_custom_call.1} parent=1 // pred_fallthru
      _
    // Predicated region
    $region30: #{tpu_custom_call.1} parent=1 // pred_check
      _
    $region31: #{tpu_custom_call.1} parent=1 // pred_check_branch
      %1389 = sbr.rel (0) target = $region33
    $region32: #{tpu_custom_call.1} parent=1 // pred_region
      %1390 = dma.done [#allocation4], 128
    $region33: #{tpu_custom_call.1} parent=1 // pred_fallthru
      _
    %1391 = vsyncpa [#allocation3], 1
    %1392 = vsyncpa [#allocation6], 1
    %1393 = vsyncpa [#allocation4], 1

</llo_original>
